<compile_context>
chip_gen: v7x
topology: tpu7x:2x2x1
jax: 0.10.0
libtpu: 0.0.40
codegen_flags: <defaults>
</compile_context>

<pallas_src>
import functools

import jax
import jax.numpy as jnp
from jax.experimental import pallas as pl
from jax.experimental.pallas import tpu as pltpu

WEIGHT_DTYPE = jnp.bfloat16
BN_EPS = 1e-5

# Footprint (weights + activations + outputs) below which the whole stack is
# held resident in VMEM and run in one grid step.  24 MB leaves headroom even
# under v7x's 64 MiB VMEM / 32 MiB scoped default.
_RESIDENT_BYTES_BUDGET = 24 * 1024 * 1024


# ---------------------------------------------------------------------------
# Primary path: everything resident in VMEM, single grid step, layer chain
# unrolled at trace time.
# ---------------------------------------------------------------------------
def _resident_mlp_kernel(x_ref, w0_ref, wstack_ref, shifts_ref, wc_ref, bc_ref,
                         logits_ref, feat_ref):
    depth = shifts_ref.shape[0]
    x = x_ref[...].astype(w0_ref.dtype)                      # bf16 MXU operands
    h = jnp.maximum(
        jnp.dot(x, w0_ref[...], preferred_element_type=jnp.float32)
        + shifts_ref[0], 0.0)
    # depth is a trace-time constant -> fully unrolled layer chain, all weights
    # already resident in VMEM (no per-layer DMA, no grid-step overhead).
    for i in range(depth - 1):
        h = jnp.maximum(
            jnp.dot(h.astype(wstack_ref.dtype), wstack_ref[i],
                    preferred_element_type=jnp.float32)
            + shifts_ref[i + 1], 0.0)
    feat_ref[...] = h                                        # (B, width) f32
    logits_ref[...] = (
        jnp.dot(h.astype(wc_ref.dtype), wc_ref[...],
                preferred_element_type=jnp.float32)
        + bc_ref[...])


def _resident_mlp(params, x2d):
    B, _ = x2d.shape
    width = params["w0"].shape[1]
    ncls_pad = params["wc"].shape[1]
    vmem = pl.BlockSpec(memory_space=pltpu.MemorySpace.VMEM)
    logits_pad, feats = pl.pallas_call(
        _resident_mlp_kernel,
        out_shape=[
            jax.ShapeDtypeStruct((B, ncls_pad), jnp.float32),   # logits (lane-padded)
            jax.ShapeDtypeStruct((B, width), jnp.float32),      # hidden features
        ],
        in_specs=[vmem] * 6,
        out_specs=[vmem, vmem],
        compiler_params=pltpu.CompilerParams(vmem_limit_bytes=32 << 20),
    )(x2d, params["w0"], params["wstack"], params["shifts"],
      params["wc"], params["bc"])
    return logits_pad, feats


# ---------------------------------------------------------------------------
# Fallback path for widths that don't fit VMEM: grid=(depth,), one grid step
# per hidden layer, per-layer weights streamed with 3-deep buffering; the
# classifier is fused into the last step.  Activation carry lives in VMEM.
# ---------------------------------------------------------------------------
def _streamed_mlp_kernel(x_ref, w0_ref, wstack_ref, shifts_ref, wc_ref, bc_ref,
                         logits_ref, feat_ref, h_ref):
    l = pl.program_id(0)
    last = pl.num_programs(0) - 1
    shift = shifts_ref[0]                     # (1, width) f32, layer l's folded shift

    @pl.when(l == 0)
    def _first_layer():
        x = x_ref[...].astype(w0_ref.dtype)
        y = jnp.dot(x, w0_ref[...], preferred_element_type=jnp.float32)
        h_ref[...] = jnp.maximum(y + shift, 0.0)

    @pl.when(l > 0)
    def _hidden_layer():
        h = h_ref[...].astype(wstack_ref.dtype)
        y = jnp.dot(h, wstack_ref[0], preferred_element_type=jnp.float32)
        h_ref[...] = jnp.maximum(y + shift, 0.0)

    @pl.when(l == last)
    def _classifier():
        feat = h_ref[...]                     # (B, width) f32
        feat_ref[...] = feat
        logits_ref[...] = (
            jnp.dot(feat.astype(wc_ref.dtype), wc_ref[...],
                    preferred_element_type=jnp.float32)
            + bc_ref[...])


def _streamed_mlp(params, x2d):
    B, input_dim = x2d.shape
    width = params["w0"].shape[1]
    depth = params["shifts"].shape[0]
    ncls_pad = params["wc"].shape[1]
    assert depth >= 2, "depth==1 always uses the resident path"

    in_specs = [
        pl.BlockSpec((B, input_dim), lambda l: (0, 0)),            # x (resident)
        pl.BlockSpec((input_dim, width), lambda l: (0, 0)),        # first-layer W'
        # Streamed per-layer weights: 3-deep buffering keeps multiple weight
        # DMAs in flight (kernel is weight-HBM bound at small batch).
        pl.BlockSpec((1, width, width),
                     lambda l: (jnp.maximum(l - 1, 0), 0, 0),
                     pipeline_mode=pl.Buffered(min(3, depth))),
        pl.BlockSpec((1, 1, width), lambda l: (l, 0, 0)),          # folded shift per layer
        pl.BlockSpec((width, ncls_pad), lambda l: (0, 0)),         # classifier W (padded)
        pl.BlockSpec((1, ncls_pad), lambda l: (0, 0)),             # classifier b (padded)
    ]
    out_specs = [
        pl.BlockSpec((B, ncls_pad), lambda l: (0, 0)),             # logits (lane-padded)
        pl.BlockSpec((B, width), lambda l: (0, 0)),                # hidden features
    ]
    out_shape = [
        jax.ShapeDtypeStruct((B, ncls_pad), jnp.float32),
        jax.ShapeDtypeStruct((B, width), jnp.float32),
    ]

    logits_pad, feats = pl.pallas_call(
        _streamed_mlp_kernel,
        out_shape=out_shape,
        grid_spec=pltpu.PrefetchScalarGridSpec(
            num_scalar_prefetch=0,
            grid=(depth,),
            in_specs=in_specs,
            out_specs=out_specs,
            scratch_shapes=[pltpu.VMEM((B, width), jnp.float32)],  # activation carry
        ),
        compiler_params=pltpu.CompilerParams(
            dimension_semantics=("arbitrary",),    # layer chain is sequential
            vmem_limit_bytes=32 << 20,
        ),
    )(x2d, params["w0"], params["wstack"], params["shifts"],
      params["wc"], params["bc"])
    return logits_pad, feats


# ---------------------------------------------------------------------------
# Parameters: raw PyTorch-like f32 params + folded bf16 kernel params.
# ---------------------------------------------------------------------------
def init_params(key, input_dim, width, depth, num_classes, eps=BN_EPS,
                weight_dtype=WEIGHT_DTYPE):
    raw_layers = []
    in_dim = input_dim
    for _ in range(depth):
        key, kw, kb, kg, kbe, km, kv = jax.random.split(key, 7)
        raw_layers.append(dict(
            w=jax.random.normal(kw, (in_dim, width), jnp.float32) * 0.02,   # (in, out)
            b=jax.random.normal(kb, (1, width), jnp.float32) * 0.01,
            gamma=1.0 + 0.1 * jax.random.normal(kg, (1, width), jnp.float32),
            beta=0.1 * jax.random.normal(kbe, (1, width), jnp.float32),
            mean=0.1 * jax.random.normal(km, (1, width), jnp.float32),
            var=1.0 + 0.1 * jax.random.uniform(kv, (1, width), jnp.float32),
        ))
        in_dim = width

    key, kw, kb = jax.random.split(key, 3)
    wc = jax.random.normal(kw, (width, num_classes), jnp.float32) * 0.02
    bc = jax.random.normal(kb, (1, num_classes), jnp.float32) * 0.01
    raw = {"layers": raw_layers, "wc": wc, "bc": bc}

    # Fold eval-mode BN + Linear bias: BN(xW + b) = scale*(xW) + shift.
    ws, shifts = [], []
    for layer in raw_layers:
        scale = layer["gamma"] / jnp.sqrt(layer["var"] + eps)
        ws.append((layer["w"] * scale).astype(weight_dtype))
        shifts.append(scale * (layer["b"] - layer["mean"]) + layer["beta"])

    # Pad classifier output to a lane-dense multiple of 128 (unmasked stores).
    ncls_pad = max(128, ((num_classes + 127) // 128) * 128)
    wc_pad = jnp.zeros((width, ncls_pad), jnp.float32).at[:, :num_classes].set(wc)
    bc_pad = jnp.zeros((1, ncls_pad), jnp.float32).at[:, :num_classes].set(bc)

    if depth > 1:
        wstack = jnp.stack(ws[1:])                               # (depth-1, width, width)
    else:
        # Tiny never-read dummy: avoids the old full (width, width) wasted DMA.
        wstack = jnp.zeros((1, 8, 128), weight_dtype)

    params = {
        "w0": ws[0],                                             # (input_dim, width) bf16
        "wstack": wstack,                                        # bf16
        "shifts": jnp.stack(shifts),                             # (depth, 1, width) f32
        "wc": wc_pad.astype(weight_dtype),                       # (width, ncls_pad) bf16
        "bc": bc_pad,                                            # (1, ncls_pad) f32
    }
    return params, raw


def _resident_footprint_bytes(params, batch):
    total = 0
    for name in ("w0", "wstack", "shifts", "wc", "bc"):
        a = params[name]
        total += a.size * a.dtype.itemsize
    input_dim = params["w0"].shape[0]
    width = params["w0"].shape[1]
    ncls_pad = params["wc"].shape[1]
    total += batch * (input_dim + width + ncls_pad) * 4
    return total


@functools.partial(jax.jit,
                   static_argnames=("input_dim", "num_classes", "force_streamed"))
def fully_connected_forward(params, x, *, input_dim, num_classes,
                            force_streamed=False):
    B = x.shape[0]
    h = x.reshape(B, input_dim).astype(jnp.float32)              # x.view(B, input_dim)
    depth = params["shifts"].shape[0]
    fits = _resident_footprint_bytes(params, B) <= _RESIDENT_BYTES_BUDGET

    if force_streamed and depth >= 2:
        logits_pad, feats = _streamed_mlp(params, h)
    elif fits or depth < 2:
        logits_pad, feats = _resident_mlp(params, h)
    else:
        logits_pad, feats = _streamed_mlp(params, h)
    return logits_pad[:, :num_classes], feats


# ---------------------------------------------------------------------------
# References.
# ---------------------------------------------------------------------------
def reference_forward_f32(raw, x, *, input_dim, num_classes, eps=BN_EPS):
    """True unfused f32 eval-mode semantics (mirrors the PyTorch module)."""
    h = x.reshape(x.shape[0], input_dim).astype(jnp.float32)
    for layer in raw["layers"]:
        y = h @ layer["w"] + layer["b"]
        y = ((y - layer["mean"]) * (layer["gamma"] / jnp.sqrt(layer["var"] + eps))
             + layer["beta"])
        h = jnp.maximum(y, 0.0)
    logits = h @ raw["wc"] + raw["bc"]
    return logits, h


def reference_forward_folded(params, x, *, input_dim, num_classes):
    """Same folded/bf16 parameters as the kernel (tight-tolerance check)."""
    h = x.reshape(x.shape[0], input_dim).astype(jnp.float32)
    depth = params["shifts"].shape[0]
    ws = [params["w0"]]
    if depth > 1:
        ws += [params["wstack"][i] for i in range(depth - 1)]
    for i in range(depth):
        y = jnp.dot(h.astype(ws[i].dtype), ws[i], preferred_element_type=jnp.float32)
        h = jnp.maximum(y + params["shifts"][i], 0.0)
    logits = jnp.dot(h.astype(params["wc"].dtype), params["wc"],
                     preferred_element_type=jnp.float32) + params["bc"]
    return logits[:, :num_classes], h


# ---------------------------------------------------------------------------
# Main
# ---------------------------------------------------------------------------
if __name__ == "__main__":
    # Small shapes consistent with the module structure.
    B = 8
    INPUT_DIM = 128     # stands in for 28*28
    WIDTH = 256         # stands in for 1024
    DEPTH = 4
    NUM_CLASSES = 10

    key = jax.random.PRNGKey(0)
    kp, kx = jax.random.split(key)
    params, raw = init_params(kp, INPUT_DIM, WIDTH, DEPTH, NUM_CLASSES)

    # Image-like input, flattened by the forward pass (like x.view(B, input_dim)).
    x = jax.random.normal(kx, (B, 1, 8, 16), jnp.float32)   # 1*8*16 == INPUT_DIM

    # Primary path: whole stack resident in VMEM, single grid step.
    logits, feats = fully_connected_forward(
        params, x, input_dim=INPUT_DIM, num_classes=NUM_CLASSES)
    jax.block_until_ready((logits, feats))
    assert logits.shape == (B, NUM_CLASSES)
    assert feats.shape == (B, WIDTH)

    # Fallback path (for widths that don't fit VMEM): streamed per-layer
    # weights with 3-deep buffering — exercised here for validation.
    logits_s, feats_s = fully_connected_forward(
        params, x, input_dim=INPUT_DIM, num_classes=NUM_CLASSES,
        force_streamed=True)
    jax.block_until_ready((logits_s, feats_s))

    # Tight check against the folded/bf16 reference (same math as the kernel).
    ref_logits_f, ref_feats_f = reference_forward_folded(
        params, x, input_dim=INPUT_DIM, num_classes=NUM_CLASSES)
    for lg, ft in ((logits, feats), (logits_s, feats_s)):
        assert jnp.allclose(lg, ref_logits_f, atol=2e-3, rtol=2e-3)
        assert jnp.allclose(ft, ref_feats_f, atol=2e-3, rtol=2e-3)

    # Check against the true unfused f32 PyTorch eval-mode semantics
    # (tolerance covers bf16 weight quantization).
    ref_logits, ref_feats = reference_forward_f32(
        raw, x, input_dim=INPUT_DIM, num_classes=NUM_CLASSES)
    for lg, ft in ((logits, feats), (logits_s, feats_s)):
        assert jnp.allclose(lg, ref_logits, atol=3e-2, rtol=3e-2)
        assert jnp.allclose(ft, ref_feats, atol=3e-2, rtol=3e-2)

    print("KERNEL_OK")
</pallas_src>

<mosaic_0001>
module attributes {stable_mosaic.version = 11 : i64} {
  func.func @_resident_mlp_kernel(%arg0: memref<8x128xf32, #tpu.memory_space<vmem>>, %arg1: memref<128x256xbf16, #tpu.memory_space<vmem>>, %arg2: memref<3x256x256xbf16, #tpu.memory_space<vmem>>, %arg3: memref<4x1x256xf32, #tpu.memory_space<vmem>>, %arg4: memref<256x128xbf16, #tpu.memory_space<vmem>>, %arg5: memref<1x128xf32, #tpu.memory_space<vmem>>, %arg6: memref<8x128xf32, #tpu.memory_space<vmem>>, %arg7: memref<8x256xf32, #tpu.memory_space<vmem>>) attributes {dimension_semantics = [], scalar_prefetch = 0 : i64, scratch_operands = 0 : i64, tpu.core_type = #tpu.core_type<tc>} {
    %c0 = arith.constant 0 : index
    %c0_0 = arith.constant 0 : index
    %0 = vector.load %arg0[%c0, %c0_0] : memref<8x128xf32, #tpu.memory_space<vmem>>, vector<8x128xf32>
    %1 = arith.truncf %0 : vector<8x128xf32> to vector<8x128xbf16>
    %c0_1 = arith.constant 0 : index
    %c0_2 = arith.constant 0 : index
    %2 = vector.load %arg1[%c0_1, %c0_2] : memref<128x256xbf16, #tpu.memory_space<vmem>>, vector<128x256xbf16>
    %cst = arith.constant dense<0.000000e+00> : vector<8x256xf32>
    %3 = tpu.matmul %1, %2, %cst {dimension_numbers = #tpu.dot_dimension_numbers<[1], [0], [0], [1], [0, 0, 1, 1], [], []>} : vector<8x128xbf16>, vector<128x256xbf16>, vector<8x256xf32> -> vector<8x256xf32>
    %c0_3 = arith.constant 0 : index
    %c0_4 = arith.constant 0 : index
    %c0_5 = arith.constant 0 : index
    %4 = vector.load %arg3[%c0_3, %c0_4, %c0_5] : memref<4x1x256xf32, #tpu.memory_space<vmem>>, vector<1x1x256xf32>
    %5 = vector.shape_cast %4 : vector<1x1x256xf32> to vector<1x256xf32>
    %6 = vector.broadcast %5 : vector<1x256xf32> to vector<8x256xf32>
    %7 = arith.addf %3, %6 : vector<8x256xf32>
    %cst_6 = arith.constant 0.000000e+00 : f32
    %8 = vector.broadcast %cst_6 : f32 to vector<8x256xf32>
    %9 = arith.maximumf %7, %8 : vector<8x256xf32>
    %10 = arith.truncf %9 : vector<8x256xf32> to vector<8x256xbf16>
    %c0_7 = arith.constant 0 : index
    %c0_8 = arith.constant 0 : index
    %c0_9 = arith.constant 0 : index
    %11 = vector.load %arg2[%c0_7, %c0_8, %c0_9] : memref<3x256x256xbf16, #tpu.memory_space<vmem>>, vector<1x256x256xbf16>
    %12 = vector.shape_cast %11 : vector<1x256x256xbf16> to vector<256x256xbf16>
    %cst_10 = arith.constant dense<0.000000e+00> : vector<8x256xf32>
    %13 = tpu.matmul %10, %12, %cst_10 {dimension_numbers = #tpu.dot_dimension_numbers<[1], [0], [0], [1], [0, 0, 1, 1], [], []>} : vector<8x256xbf16>, vector<256x256xbf16>, vector<8x256xf32> -> vector<8x256xf32>
    %c1 = arith.constant 1 : index
    %c0_11 = arith.constant 0 : index
    %c0_12 = arith.constant 0 : index
    %14 = vector.load %arg3[%c1, %c0_11, %c0_12] : memref<4x1x256xf32, #tpu.memory_space<vmem>>, vector<1x1x256xf32>
    %15 = vector.shape_cast %14 : vector<1x1x256xf32> to vector<1x256xf32>
    %16 = vector.broadcast %15 : vector<1x256xf32> to vector<8x256xf32>
    %17 = arith.addf %13, %16 : vector<8x256xf32>
    %cst_13 = arith.constant 0.000000e+00 : f32
    %18 = vector.broadcast %cst_13 : f32 to vector<8x256xf32>
    %19 = arith.maximumf %17, %18 : vector<8x256xf32>
    %20 = arith.truncf %19 : vector<8x256xf32> to vector<8x256xbf16>
    %c1_14 = arith.constant 1 : index
    %c0_15 = arith.constant 0 : index
    %c0_16 = arith.constant 0 : index
    %21 = vector.load %arg2[%c1_14, %c0_15, %c0_16] : memref<3x256x256xbf16, #tpu.memory_space<vmem>>, vector<1x256x256xbf16>
    %22 = vector.shape_cast %21 : vector<1x256x256xbf16> to vector<256x256xbf16>
    %cst_17 = arith.constant dense<0.000000e+00> : vector<8x256xf32>
    %23 = tpu.matmul %20, %22, %cst_17 {dimension_numbers = #tpu.dot_dimension_numbers<[1], [0], [0], [1], [0, 0, 1, 1], [], []>} : vector<8x256xbf16>, vector<256x256xbf16>, vector<8x256xf32> -> vector<8x256xf32>
    %c2 = arith.constant 2 : index
    %c0_18 = arith.constant 0 : index
    %c0_19 = arith.constant 0 : index
    %24 = vector.load %arg3[%c2, %c0_18, %c0_19] : memref<4x1x256xf32, #tpu.memory_space<vmem>>, vector<1x1x256xf32>
    %25 = vector.shape_cast %24 : vector<1x1x256xf32> to vector<1x256xf32>
    %26 = vector.broadcast %25 : vector<1x256xf32> to vector<8x256xf32>
    %27 = arith.addf %23, %26 : vector<8x256xf32>
    %cst_20 = arith.constant 0.000000e+00 : f32
    %28 = vector.broadcast %cst_20 : f32 to vector<8x256xf32>
    %29 = arith.maximumf %27, %28 : vector<8x256xf32>
    %30 = arith.truncf %29 : vector<8x256xf32> to vector<8x256xbf16>
    %c2_21 = arith.constant 2 : index
    %c0_22 = arith.constant 0 : index
    %c0_23 = arith.constant 0 : index
    %31 = vector.load %arg2[%c2_21, %c0_22, %c0_23] : memref<3x256x256xbf16, #tpu.memory_space<vmem>>, vector<1x256x256xbf16>
    %32 = vector.shape_cast %31 : vector<1x256x256xbf16> to vector<256x256xbf16>
    %cst_24 = arith.constant dense<0.000000e+00> : vector<8x256xf32>
    %33 = tpu.matmul %30, %32, %cst_24 {dimension_numbers = #tpu.dot_dimension_numbers<[1], [0], [0], [1], [0, 0, 1, 1], [], []>} : vector<8x256xbf16>, vector<256x256xbf16>, vector<8x256xf32> -> vector<8x256xf32>
    %c3 = arith.constant 3 : index
    %c0_25 = arith.constant 0 : index
    %c0_26 = arith.constant 0 : index
    %34 = vector.load %arg3[%c3, %c0_25, %c0_26] : memref<4x1x256xf32, #tpu.memory_space<vmem>>, vector<1x1x256xf32>
    %35 = vector.shape_cast %34 : vector<1x1x256xf32> to vector<1x256xf32>
    %36 = vector.broadcast %35 : vector<1x256xf32> to vector<8x256xf32>
    %37 = arith.addf %33, %36 : vector<8x256xf32>
    %cst_27 = arith.constant 0.000000e+00 : f32
    %38 = vector.broadcast %cst_27 : f32 to vector<8x256xf32>
    %39 = arith.maximumf %37, %38 : vector<8x256xf32>
    %c0_28 = arith.constant 0 : index
    %c0_29 = arith.constant 0 : index
    %40 = vector.load %arg7[%c0_28, %c0_29] : memref<8x256xf32, #tpu.memory_space<vmem>>, vector<8x256xf32>
    tpu.vector_store %arg7[%c0_28, %c0_29], %39 {strides = array<i32>} : memref<8x256xf32, #tpu.memory_space<vmem>>, vector<8x256xf32>,
    %41 = arith.truncf %39 : vector<8x256xf32> to vector<8x256xbf16>
    %c0_30 = arith.constant 0 : index
    %c0_31 = arith.constant 0 : index
    %42 = vector.load %arg4[%c0_30, %c0_31] : memref<256x128xbf16, #tpu.memory_space<vmem>>, vector<256x128xbf16>
    %cst_32 = arith.constant dense<0.000000e+00> : vector<8x128xf32>
    %43 = tpu.matmul %41, %42, %cst_32 {dimension_numbers = #tpu.dot_dimension_numbers<[1], [0], [0], [1], [0, 0, 1, 1], [], []>} : vector<8x256xbf16>, vector<256x128xbf16>, vector<8x128xf32> -> vector<8x128xf32>
    %c0_33 = arith.constant 0 : index
    %c0_34 = arith.constant 0 : index
    %44 = vector.load %arg5[%c0_33, %c0_34] : memref<1x128xf32, #tpu.memory_space<vmem>>, vector<1x128xf32>
    %45 = vector.broadcast %44 : vector<1x128xf32> to vector<8x128xf32>
    %46 = arith.addf %43, %45 : vector<8x128xf32>
    %c0_35 = arith.constant 0 : index
    %c0_36 = arith.constant 0 : index
    %47 = vector.load %arg6[%c0_35, %c0_36] : memref<8x128xf32, #tpu.memory_space<vmem>>, vector<8x128xf32>
    tpu.vector_store %arg6[%c0_35, %c0_36], %46 {strides = array<i32>} : memref<8x128xf32, #tpu.memory_space<vmem>>, vector<8x128xf32>,
    return
  }
}

</mosaic_0001>

<llo_original>
// kernel: fully_connected_forward.1
$region0: #{fully_connected_forward.1}
  #allocation0 [shape = 'u32[]', space=smem, size = 0x4, offset = 0x4, fixed_abs, tag = 'smem constant byte address 0x4 - core index']
  #allocation1 [shape = 'u32[144,128]{1,0:T(1,128)}', space=vmem, size = 0x12000, scoped, tag = 'internal scratch']
  %s0 = inlined_call_operand.vmem [shape: f32[8,128], index: 0, kind: input, shape index: {}]
  %s1 = inlined_call_operand.hbm [shape: bf16[128,256], index: 1, kind: input, shape index: {}]
  %s2 = inlined_call_operand.hbm [shape: bf16[3,256,256], index: 2, kind: input, shape index: {}]
  %s3 = inlined_call_operand.vmem [shape: f32[4,1,256], index: 3, kind: input, shape index: {}]
  %s4 = inlined_call_operand.hbm [shape: bf16[256,128], index: 4, kind: input, shape index: {}]
  %s5 = inlined_call_operand.vmem [shape: f32[1,128], index: 5, kind: input, shape index: {}]
  %s6 = inlined_call_operand.hbm [shape: f32[8,128], index: 6, kind: output, shape index: {0}]
  %s7 = inlined_call_operand.hbm [shape: f32[8,256], index: 7, kind: output, shape index: {1}]
  %8 = xla_tuple %s6, %s7
  %s9 = sld [smem:[#allocation0]]
  $region54: #{fully_connected_forward.1} parent=0
    _
  %s11 = ssub.s32 1, %s9
  %s12 = scalar_select 0, %s11, %s9
  $region1: #{fully_connected_forward.1} parent=0
    #allocation2 [shape = 'u8[65536]{0}', space=vmem, size = 0x10000, scoped, tag = 'input window, operand 1, single buffered']
    #allocation3 [shape = 's32[1]{0}', space=sflag, size = 0x4, scoped, tag = 'scoped memory for fully_connected_forward.1']
    #allocation4 [shape = 's32[1]{0}', space=sflag, size = 0x4, scoped, tag = 'scoped memory for fully_connected_forward.1']
    #allocation5 [shape = 'u8[393216]{0}', space=vmem, size = 0x60000, scoped, tag = 'input window, operand 2, single buffered']
    #allocation6 [shape = 's32[1]{0}', space=sflag, size = 0x4, scoped, tag = 'scoped memory for fully_connected_forward.1']
    #allocation7 [shape = 'u8[65536]{0}', space=vmem, size = 0x10000, scoped, tag = 'input window, operand 4, single buffered']
    #allocation8 [shape = 'u8[4096]{0}', space=vmem, size = 0x1000, scoped, tag = 'output window, operand 0, single buffered']
    #allocation9 [shape = 'u8[8192]{0}', space=vmem, size = 0x2000, scoped, tag = 'output window, operand 1, single buffered']
    #allocation10 [shape = 's32[1]{0}', space=sflag, size = 0x4, scoped, tag = 'scoped memory for fully_connected_forward.1']
    %13 = vsyncpa [#allocation3], 0
    %14 = vsyncpa [#allocation6], 0
    %15 = vsyncpa [#allocation4], 0
    %16 = vsyncpa [#allocation10], 0
    // Predicated region
    $region2: #{fully_connected_forward.1} parent=1 // pred_check
      _
    $region3: #{fully_connected_forward.1} parent=1 // pred_check_branch
      %18 = sbr.rel (0) target = $region5
    $region4: #{fully_connected_forward.1} parent=1 // pred_region
      _
    $region5: #{fully_connected_forward.1} parent=1 // pred_fallthru
      _
    // Predicated region
    $region6: #{fully_connected_forward.1} parent=1 // pred_check
      _
    $region7: #{fully_connected_forward.1} parent=1 // pred_check_branch
      %20 = sbr.rel (0) target = $region9
    $region8: #{fully_connected_forward.1} parent=1 // pred_region
      %s22 = ssub.s32 2048, 2048
      %23 = vsyncadd [#allocation3], %s22
      %s24 = sshll.u32 [#allocation2], 4
      %s25 = int_to_ptr.vmem [resolvable:$true] %s24
      %30 = dma.hbm_to_vmem [thread:$0]  %s1, 2048, %s25, [#allocation3], 128, 128, 8
    $region9: #{fully_connected_forward.1} parent=1 // pred_fallthru
      _
    // Predicated region
    $region10: #{fully_connected_forward.1} parent=1 // pred_check
      _
    $region11: #{fully_connected_forward.1} parent=1 // pred_check_branch
      %32 = sbr.rel (0) target = $region13
    $region12: #{fully_connected_forward.1} parent=1 // pred_region
      %s34 = ssub.s32 12288, 12288
      %35 = vsyncadd [#allocation6], %s34
      %s36 = sshll.u32 [#allocation5], 4
      %s37 = int_to_ptr.vmem [resolvable:$true] %s36
      %42 = dma.hbm_to_vmem [thread:$0]  %s2, 12288, %s37, [#allocation6], 128, 128, 8
    $region13: #{fully_connected_forward.1} parent=1 // pred_fallthru
      _
    // Predicated region
    $region14: #{fully_connected_forward.1} parent=1 // pred_check
      _
    $region15: #{fully_connected_forward.1} parent=1 // pred_check_branch
      %44 = sbr.rel (0) target = $region17
    $region16: #{fully_connected_forward.1} parent=1 // pred_region
      _
    $region17: #{fully_connected_forward.1} parent=1 // pred_fallthru
      _
    // Predicated region
    $region18: #{fully_connected_forward.1} parent=1 // pred_check
      _
    $region19: #{fully_connected_forward.1} parent=1 // pred_check_branch
      %46 = sbr.rel (0) target = $region21
    $region20: #{fully_connected_forward.1} parent=1 // pred_region
      %s48 = ssub.s32 2048, 2048
      %49 = vsyncadd [#allocation6], %s48
      %s50 = sshll.u32 [#allocation7], 4
      %s51 = int_to_ptr.vmem [resolvable:$true] %s50
      %56 = dma.hbm_to_vmem [thread:$0]  %s4, 2048, %s51, [#allocation6], 64, 64, 4
    $region21: #{fully_connected_forward.1} parent=1 // pred_fallthru
      _
    // Predicated region
    $region22: #{fully_connected_forward.1} parent=1 // pred_check
      _
    $region23: #{fully_connected_forward.1} parent=1 // pred_check_branch
      %58 = sbr.rel (0) target = $region25
    $region24: #{fully_connected_forward.1} parent=1 // pred_region
      _
    $region25: #{fully_connected_forward.1} parent=1 // pred_fallthru
      _
    // Predicated region
    $region26: #{fully_connected_forward.1} parent=1 // pred_check
      _
    $region27: #{fully_connected_forward.1} parent=1 // pred_check_branch
      %60 = sbr.rel (0) target = $region29
    $region28: #{fully_connected_forward.1} parent=1 // pred_region
      %61 = dma.done [#allocation3], 2048
    $region29: #{fully_connected_forward.1} parent=1 // pred_fallthru
      _
    // Predicated region
    $region30: #{fully_connected_forward.1} parent=1 // pred_check
      _
    $region31: #{fully_connected_forward.1} parent=1 // pred_check_branch
      %63 = sbr.rel (0) target = $region33
    $region32: #{fully_connected_forward.1} parent=1 // pred_region
      %64 = dma.done [#allocation6], 12288
    $region33: #{fully_connected_forward.1} parent=1 // pred_fallthru
      _
    // Predicated region
    $region34: #{fully_connected_forward.1} parent=1 // pred_check
      _
    $region35: #{fully_connected_forward.1} parent=1 // pred_check_branch
      %66 = sbr.rel (0) target = $region37
    $region36: #{fully_connected_forward.1} parent=1 // pred_region
      %67 = dma.done [#allocation6], 2048
    $region37: #{fully_connected_forward.1} parent=1 // pred_fallthru
      _
    %v69 = vld [vmem:[%s0] sm:$0xff]
    %v70 = vpack.c.bf16 %v69, %v69
    %v71 = vld [vmem:[#allocation2] sm:$0xff]
    %v72 = vld [vmem:[#allocation2 + $0x8] sm:$0xff]
    %v73 = vld [vmem:[#allocation2 + $0x10] sm:$0xff]
    %v74 = vld [vmem:[#allocation2 + $0x18] sm:$0xff]
    %v75 = vld [vmem:[#allocation2 + $0x20] sm:$0xff]
    %v76 = vld [vmem:[#allocation2 + $0x28] sm:$0xff]
    %v77 = vld [vmem:[#allocation2 + $0x30] sm:$0xff]
    %v78 = vld [vmem:[#allocation2 + $0x38] sm:$0xff]
    %v79 = vld [vmem:[#allocation2 + $0x40] sm:$0xff]
    %v80 = vld [vmem:[#allocation2 + $0x48] sm:$0xff]
    %v81 = vld [vmem:[#allocation2 + $0x50] sm:$0xff]
    %v82 = vld [vmem:[#allocation2 + $0x58] sm:$0xff]
    %v83 = vld [vmem:[#allocation2 + $0x60] sm:$0xff]
    %v84 = vld [vmem:[#allocation2 + $0x68] sm:$0xff]
    %v85 = vld [vmem:[#allocation2 + $0x70] sm:$0xff]
    %v86 = vld [vmem:[#allocation2 + $0x78] sm:$0xff]
    %v87 = vld [vmem:[%s3] sm:$0x3]
    %v89 = vlaneseq
    %v90 = vshrl.u32 %v89, 7
    %v91 = vsub.s32 0, %v90
    %v92 = vrot.slane %v87, %v91
    %v93 = vlaneseq
    %v94 = vshrl.u32 %v93, 7
    %v95 = vsub.s32 1, %v94
    %v96 = vrot.slane %v87, %v95
    %v115 = vunpack.c.l.b16 %v71
    %v116 = vunpack.c.h.b16 %v71
    %v117 = vunpack.c.l.b16 %v72
    %v118 = vunpack.c.h.b16 %v72
    %v119 = vunpack.c.l.b16 %v73
    %v120 = vunpack.c.h.b16 %v73
    %v121 = vunpack.c.l.b16 %v74
    %v122 = vunpack.c.h.b16 %v74
    %v123 = vunpack.c.l.b16 %v75
    %v124 = vunpack.c.h.b16 %v75
    %v125 = vunpack.c.l.b16 %v76
    %v126 = vunpack.c.h.b16 %v76
    %v127 = vunpack.c.l.b16 %v77
    %v128 = vunpack.c.h.b16 %v77
    %v129 = vunpack.c.l.b16 %v78
    %v130 = vunpack.c.h.b16 %v78
    %v131 = vunpack.c.l.b16 %v79
    %v132 = vunpack.c.h.b16 %v79
    %v133 = vunpack.c.l.b16 %v80
    %v134 = vunpack.c.h.b16 %v80
    %v135 = vunpack.c.l.b16 %v81
    %v136 = vunpack.c.h.b16 %v81
    %v137 = vunpack.c.l.b16 %v82
    %v138 = vunpack.c.h.b16 %v82
    %v139 = vunpack.c.l.b16 %v83
    %v140 = vunpack.c.h.b16 %v83
    %v141 = vunpack.c.l.b16 %v84
    %v142 = vunpack.c.h.b16 %v84
    %v143 = vunpack.c.l.b16 %v85
    %v144 = vunpack.c.h.b16 %v85
    %v145 = vunpack.c.l.b16 %v86
    %v146 = vunpack.c.h.b16 %v86
    %v147 = vpack.c.b16 %v117, %v115
    %v148 = vpack.c.b16 %v118, %v116
    %v149 = vpack.c.b16 %v121, %v119
    %v150 = vpack.c.b16 %v122, %v120
    %v151 = vpack.c.b16 %v125, %v123
    %v152 = vpack.c.b16 %v126, %v124
    %v153 = vpack.c.b16 %v129, %v127
    %v154 = vpack.c.b16 %v130, %v128
    %v155 = vpack.c.b16 %v133, %v131
    %v156 = vpack.c.b16 %v134, %v132
    %v157 = vpack.c.b16 %v137, %v135
    %v158 = vpack.c.b16 %v138, %v136
    %v159 = vpack.c.b16 %v141, %v139
    %v160 = vpack.c.b16 %v142, %v140
    %v161 = vpack.c.b16 %v145, %v143
    %v162 = vpack.c.b16 %v146, %v144
    %179 = vmatprep.subr.bf16.mxu0 %v148
    %180 = vmatpush1.bf16.msra.mxu0 %v147
    %181 = vmatprep.subr.bf16.mxu0 %v150
    %182 = vmatpush1.bf16.msra.mxu0 %v149
    %183 = vmatprep.subr.bf16.mxu0 %v152
    %184 = vmatpush1.bf16.msra.mxu0 %v151
    %185 = vmatprep.subr.bf16.mxu0 %v154
    %186 = vmatpush1.bf16.msra.mxu0 %v153
    %187 = vmatprep.subr.bf16.mxu0 %v156
    %188 = vmatpush1.bf16.msra.mxu0 %v155
    %189 = vmatprep.subr.bf16.mxu0 %v158
    %190 = vmatpush1.bf16.msra.mxu0 %v157
    %191 = vmatprep.subr.bf16.mxu0 %v160
    %192 = vmatpush1.bf16.msra.mxu0 %v159
    %193 = vmatprep.subr.bf16.mxu0 %v162
    %194 = vmatpush1.bf16.msra.mxu0 %v161
    %195 = vmatprep.subr.bf16.mxu0 0
    %196 = vmatpush1.bf16.msra.mxu0 0
    %197 = vmatprep.subr.bf16.mxu0 0
    %198 = vmatpush1.bf16.msra.mxu0 0
    %199 = vmatprep.subr.bf16.mxu0 0
    %200 = vmatpush1.bf16.msra.mxu0 0
    %201 = vmatprep.subr.bf16.mxu0 0
    %202 = vmatpush1.bf16.msra.mxu0 0
    %203 = vmatprep.subr.bf16.mxu0 0
    %204 = vmatpush1.bf16.msra.mxu0 0
    %205 = vmatprep.subr.bf16.mxu0 0
    %206 = vmatpush1.bf16.msra.mxu0 0
    %207 = vmatprep.subr.bf16.mxu0 0
    %208 = vmatpush1.bf16.msra.mxu0 0
    %209 = vmatprep.subr.bf16.mxu0 0
    %210 = vmatpush1.bf16.msra.mxu0 0
    %211 = vmatprep.mubr.bf16.mxu0 0
    %212 = vmatmul.mubr.bf16.gmra.mrb[0].mxu0 %v70
    %v213 = vpop.f32.mrb[0].mxu0
    %v214 = vadd.f32 %v92, %v213
    %v215 = vpop.f32.mrb[0].mxu0
    %v216 = vadd.f32 %v96, %v215
    %v217 = vpop.f32.mrb[0].mxu0
    %v218 = vpop.f32.mrb[0].mxu0
    %219 = vdwg.mxu0
    %v220 = vmax.f32 %v214, 0.0
    %v221 = vmax.f32 %v216, 0.0
    %v222 = vpack.c.bf16 %v220, %v220
    %v223 = vpack.c.bf16 %v221, %v221
    %v224 = vld [vmem:[#allocation5] sm:$0xff]
    %v225 = vld [vmem:[#allocation5 + $0x8] sm:$0xff]
    %v226 = vld [vmem:[#allocation5 + $0x10] sm:$0xff]
    %v227 = vld [vmem:[#allocation5 + $0x18] sm:$0xff]
    %v228 = vld [vmem:[#allocation5 + $0x20] sm:$0xff]
    %v229 = vld [vmem:[#allocation5 + $0x28] sm:$0xff]
    %v230 = vld [vmem:[#allocation5 + $0x30] sm:$0xff]
    %v231 = vld [vmem:[#allocation5 + $0x38] sm:$0xff]
    %v232 = vld [vmem:[#allocation5 + $0x40] sm:$0xff]
    %v233 = vld [vmem:[#allocation5 + $0x48] sm:$0xff]
    %v234 = vld [vmem:[#allocation5 + $0x50] sm:$0xff]
    %v235 = vld [vmem:[#allocation5 + $0x58] sm:$0xff]
    %v236 = vld [vmem:[#allocation5 + $0x60] sm:$0xff]
    %v237 = vld [vmem:[#allocation5 + $0x68] sm:$0xff]
    %v238 = vld [vmem:[#allocation5 + $0x70] sm:$0xff]
    %v239 = vld [vmem:[#allocation5 + $0x78] sm:$0xff]
    %v240 = vld [vmem:[#allocation5 + $0x80] sm:$0xff]
    %v241 = vld [vmem:[#allocation5 + $0x88] sm:$0xff]
    %v242 = vld [vmem:[#allocation5 + $0x90] sm:$0xff]
    %v243 = vld [vmem:[#allocation5 + $0x98] sm:$0xff]
    %v244 = vld [vmem:[#allocation5 + $0xa0] sm:$0xff]
    %v245 = vld [vmem:[#allocation5 + $0xa8] sm:$0xff]
    %v246 = vld [vmem:[#allocation5 + $0xb0] sm:$0xff]
    %v247 = vld [vmem:[#allocation5 + $0xb8] sm:$0xff]
    %v248 = vld [vmem:[#allocation5 + $0xc0] sm:$0xff]
    %v249 = vld [vmem:[#allocation5 + $0xc8] sm:$0xff]
    %v250 = vld [vmem:[#allocation5 + $0xd0] sm:$0xff]
    %v251 = vld [vmem:[#allocation5 + $0xd8] sm:$0xff]
    %v252 = vld [vmem:[#allocation5 + $0xe0] sm:$0xff]
    %v253 = vld [vmem:[#allocation5 + $0xe8] sm:$0xff]
    %v254 = vld [vmem:[#allocation5 + $0xf0] sm:$0xff]
    %v255 = vld [vmem:[#allocation5 + $0xf8] sm:$0xff]
    %s256 = scalar_lea.vmem %s3, 2
    %v257 = vld [vmem:[%s256] sm:$0x3]
    %v259 = vlaneseq
    %v260 = vshrl.u32 %v259, 7
    %v261 = vsub.s32 0, %v260
    %v262 = vrot.slane %v257, %v261
    %v263 = vlaneseq
    %v264 = vshrl.u32 %v263, 7
    %v265 = vsub.s32 1, %v264
    %v266 = vrot.slane %v257, %v265
    %v301 = vunpack.c.l.b16 %v224
    %v302 = vunpack.c.h.b16 %v224
    %v303 = vunpack.c.l.b16 %v225
    %v304 = vunpack.c.h.b16 %v225
    %v305 = vunpack.c.l.b16 %v226
    %v306 = vunpack.c.h.b16 %v226
    %v307 = vunpack.c.l.b16 %v227
    %v308 = vunpack.c.h.b16 %v227
    %v309 = vunpack.c.l.b16 %v228
    %v310 = vunpack.c.h.b16 %v228
    %v311 = vunpack.c.l.b16 %v229
    %v312 = vunpack.c.h.b16 %v229
    %v313 = vunpack.c.l.b16 %v230
    %v314 = vunpack.c.h.b16 %v230
    %v315 = vunpack.c.l.b16 %v231
    %v316 = vunpack.c.h.b16 %v231
    %v317 = vunpack.c.l.b16 %v232
    %v318 = vunpack.c.h.b16 %v232
    %v319 = vunpack.c.l.b16 %v233
    %v320 = vunpack.c.h.b16 %v233
    %v321 = vunpack.c.l.b16 %v234
    %v322 = vunpack.c.h.b16 %v234
    %v323 = vunpack.c.l.b16 %v235
    %v324 = vunpack.c.h.b16 %v235
    %v325 = vunpack.c.l.b16 %v236
    %v326 = vunpack.c.h.b16 %v236
    %v327 = vunpack.c.l.b16 %v237
    %v328 = vunpack.c.h.b16 %v237
    %v329 = vunpack.c.l.b16 %v238
    %v330 = vunpack.c.h.b16 %v238
    %v331 = vunpack.c.l.b16 %v239
    %v332 = vunpack.c.h.b16 %v239
    %v333 = vunpack.c.l.b16 %v240
    %v334 = vunpack.c.h.b16 %v240
    %v335 = vunpack.c.l.b16 %v241
    %v336 = vunpack.c.h.b16 %v241
    %v337 = vunpack.c.l.b16 %v242
    %v338 = vunpack.c.h.b16 %v242
    %v339 = vunpack.c.l.b16 %v243
    %v340 = vunpack.c.h.b16 %v243
    %v341 = vunpack.c.l.b16 %v244
    %v342 = vunpack.c.h.b16 %v244
    %v343 = vunpack.c.l.b16 %v245
    %v344 = vunpack.c.h.b16 %v245
    %v345 = vunpack.c.l.b16 %v246
    %v346 = vunpack.c.h.b16 %v246
    %v347 = vunpack.c.l.b16 %v247
    %v348 = vunpack.c.h.b16 %v247
    %v349 = vunpack.c.l.b16 %v248
    %v350 = vunpack.c.h.b16 %v248
    %v351 = vunpack.c.l.b16 %v249
    %v352 = vunpack.c.h.b16 %v249
    %v353 = vunpack.c.l.b16 %v250
    %v354 = vunpack.c.h.b16 %v250
    %v355 = vunpack.c.l.b16 %v251
    %v356 = vunpack.c.h.b16 %v251
    %v357 = vunpack.c.l.b16 %v252
    %v358 = vunpack.c.h.b16 %v252
    %v359 = vunpack.c.l.b16 %v253
    %v360 = vunpack.c.h.b16 %v253
    %v361 = vunpack.c.l.b16 %v254
    %v362 = vunpack.c.h.b16 %v254
    %v363 = vunpack.c.l.b16 %v255
    %v364 = vunpack.c.h.b16 %v255
    %v365 = vpack.c.b16 %v303, %v301
    %v366 = vpack.c.b16 %v304, %v302
    %v367 = vpack.c.b16 %v307, %v305
    %v368 = vpack.c.b16 %v308, %v306
    %v369 = vpack.c.b16 %v311, %v309
    %v370 = vpack.c.b16 %v312, %v310
    %v371 = vpack.c.b16 %v315, %v313
    %v372 = vpack.c.b16 %v316, %v314
    %v373 = vpack.c.b16 %v319, %v317
    %v374 = vpack.c.b16 %v320, %v318
    %v375 = vpack.c.b16 %v323, %v321
    %v376 = vpack.c.b16 %v324, %v322
    %v377 = vpack.c.b16 %v327, %v325
    %v378 = vpack.c.b16 %v328, %v326
    %v379 = vpack.c.b16 %v331, %v329
    %v380 = vpack.c.b16 %v332, %v330
    %v381 = vpack.c.b16 %v335, %v333
    %v382 = vpack.c.b16 %v336, %v334
    %v383 = vpack.c.b16 %v339, %v337
    %v384 = vpack.c.b16 %v340, %v338
    %v385 = vpack.c.b16 %v343, %v341
    %v386 = vpack.c.b16 %v344, %v342
    %v387 = vpack.c.b16 %v347, %v345
    %v388 = vpack.c.b16 %v348, %v346
    %v389 = vpack.c.b16 %v351, %v349
    %v390 = vpack.c.b16 %v352, %v350
    %v391 = vpack.c.b16 %v355, %v353
    %v392 = vpack.c.b16 %v356, %v354
    %v393 = vpack.c.b16 %v359, %v357
    %v394 = vpack.c.b16 %v360, %v358
    %v395 = vpack.c.b16 %v363, %v361
    %v396 = vpack.c.b16 %v364, %v362
    %429 = vmatprep.subr.bf16.mxu0 %v366
    %430 = vmatpush1.bf16.msra.mxu0 %v365
    %431 = vmatprep.subr.bf16.mxu0 %v368
    %432 = vmatpush1.bf16.msra.mxu0 %v367
    %433 = vmatprep.subr.bf16.mxu0 %v370
    %434 = vmatpush1.bf16.msra.mxu0 %v369
    %435 = vmatprep.subr.bf16.mxu0 %v372
    %436 = vmatpush1.bf16.msra.mxu0 %v371
    %437 = vmatprep.subr.bf16.mxu0 %v374
    %438 = vmatpush1.bf16.msra.mxu0 %v373
    %439 = vmatprep.subr.bf16.mxu0 %v376
    %440 = vmatpush1.bf16.msra.mxu0 %v375
    %441 = vmatprep.subr.bf16.mxu0 %v378
    %442 = vmatpush1.bf16.msra.mxu0 %v377
    %443 = vmatprep.subr.bf16.mxu0 %v380
    %444 = vmatpush1.bf16.msra.mxu0 %v379
    %445 = vmatprep.subr.bf16.mxu0 %v382
    %446 = vmatpush1.bf16.msra.mxu0 %v381
    %447 = vmatprep.subr.bf16.mxu0 %v384
    %448 = vmatpush1.bf16.msra.mxu0 %v383
    %449 = vmatprep.subr.bf16.mxu0 %v386
    %450 = vmatpush1.bf16.msra.mxu0 %v385
    %451 = vmatprep.subr.bf16.mxu0 %v388
    %452 = vmatpush1.bf16.msra.mxu0 %v387
    %453 = vmatprep.subr.bf16.mxu0 %v390
    %454 = vmatpush1.bf16.msra.mxu0 %v389
    %455 = vmatprep.subr.bf16.mxu0 %v392
    %456 = vmatpush1.bf16.msra.mxu0 %v391
    %457 = vmatprep.subr.bf16.mxu0 %v394
    %458 = vmatpush1.bf16.msra.mxu0 %v393
    %459 = vmatprep.subr.bf16.mxu0 %v396
    %460 = vmatpush1.bf16.msra.mxu0 %v395
    %461 = vmatprep.mubr.bf16.mxu0 %v223
    %462 = vmatmul.mubr.bf16.gmra.mrb[0].mxu0 %v222
    %v463 = vpop.f32.mrb[0].mxu0
    %v464 = vadd.f32 %v262, %v463
    %v465 = vpop.f32.mrb[0].mxu0
    %v466 = vadd.f32 %v266, %v465
    %v467 = vpop.f32.mrb[0].mxu0
    %v468 = vpop.f32.mrb[0].mxu0
    %469 = vdwg.mxu0
    %v470 = vmax.f32 %v464, 0.0
    %v471 = vmax.f32 %v466, 0.0
    %v472 = vpack.c.bf16 %v470, %v470
    %v473 = vpack.c.bf16 %v471, %v471
    %s474 = scalar_lea.vmem [#allocation5], 256
    %v475 = vld [vmem:[%s474] sm:$0xff]
    %v476 = vld [vmem:[%s474 + $0x8] sm:$0xff]
    %v477 = vld [vmem:[%s474 + $0x10] sm:$0xff]
    %v478 = vld [vmem:[%s474 + $0x18] sm:$0xff]
    %v479 = vld [vmem:[%s474 + $0x20] sm:$0xff]
    %v480 = vld [vmem:[%s474 + $0x28] sm:$0xff]
    %v481 = vld [vmem:[%s474 + $0x30] sm:$0xff]
    %v482 = vld [vmem:[%s474 + $0x38] sm:$0xff]
    %v483 = vld [vmem:[%s474 + $0x40] sm:$0xff]
    %v484 = vld [vmem:[%s474 + $0x48] sm:$0xff]
    %v485 = vld [vmem:[%s474 + $0x50] sm:$0xff]
    %v486 = vld [vmem:[%s474 + $0x58] sm:$0xff]
    %v487 = vld [vmem:[%s474 + $0x60] sm:$0xff]
    %v488 = vld [vmem:[%s474 + $0x68] sm:$0xff]
    %v489 = vld [vmem:[%s474 + $0x70] sm:$0xff]
    %v490 = vld [vmem:[%s474 + $0x78] sm:$0xff]
    %v491 = vld [vmem:[%s474 + $0x80] sm:$0xff]
    %v492 = vld [vmem:[%s474 + $0x88] sm:$0xff]
    %v493 = vld [vmem:[%s474 + $0x90] sm:$0xff]
    %v494 = vld [vmem:[%s474 + $0x98] sm:$0xff]
    %v495 = vld [vmem:[%s474 + $0xa0] sm:$0xff]
    %v496 = vld [vmem:[%s474 + $0xa8] sm:$0xff]
    %v497 = vld [vmem:[%s474 + $0xb0] sm:$0xff]
    %v498 = vld [vmem:[%s474 + $0xb8] sm:$0xff]
    %v499 = vld [vmem:[%s474 + $0xc0] sm:$0xff]
    %v500 = vld [vmem:[%s474 + $0xc8] sm:$0xff]
    %v501 = vld [vmem:[%s474 + $0xd0] sm:$0xff]
    %v502 = vld [vmem:[%s474 + $0xd8] sm:$0xff]
    %v503 = vld [vmem:[%s474 + $0xe0] sm:$0xff]
    %v504 = vld [vmem:[%s474 + $0xe8] sm:$0xff]
    %v505 = vld [vmem:[%s474 + $0xf0] sm:$0xff]
    %v506 = vld [vmem:[%s474 + $0xf8] sm:$0xff]
    %s507 = scalar_lea.vmem %s3, 4
    %v508 = vld [vmem:[%s507] sm:$0x3]
    %v510 = vlaneseq
    %v511 = vshrl.u32 %v510, 7
    %v512 = vsub.s32 0, %v511
    %v513 = vrot.slane %v508, %v512
    %v514 = vlaneseq
    %v515 = vshrl.u32 %v514, 7
    %v516 = vsub.s32 1, %v515
    %v517 = vrot.slane %v508, %v516
    %v552 = vunpack.c.l.b16 %v475
    %v553 = vunpack.c.h.b16 %v475
    %v554 = vunpack.c.l.b16 %v476
    %v555 = vunpack.c.h.b16 %v476
    %v556 = vunpack.c.l.b16 %v477
    %v557 = vunpack.c.h.b16 %v477
    %v558 = vunpack.c.l.b16 %v478
    %v559 = vunpack.c.h.b16 %v478
    %v560 = vunpack.c.l.b16 %v479
    %v561 = vunpack.c.h.b16 %v479
    %v562 = vunpack.c.l.b16 %v480
    %v563 = vunpack.c.h.b16 %v480
    %v564 = vunpack.c.l.b16 %v481
    %v565 = vunpack.c.h.b16 %v481
    %v566 = vunpack.c.l.b16 %v482
    %v567 = vunpack.c.h.b16 %v482
    %v568 = vunpack.c.l.b16 %v483
    %v569 = vunpack.c.h.b16 %v483
    %v570 = vunpack.c.l.b16 %v484
    %v571 = vunpack.c.h.b16 %v484
    %v572 = vunpack.c.l.b16 %v485
    %v573 = vunpack.c.h.b16 %v485
    %v574 = vunpack.c.l.b16 %v486
    %v575 = vunpack.c.h.b16 %v486
    %v576 = vunpack.c.l.b16 %v487
    %v577 = vunpack.c.h.b16 %v487
    %v578 = vunpack.c.l.b16 %v488
    %v579 = vunpack.c.h.b16 %v488
    %v580 = vunpack.c.l.b16 %v489
    %v581 = vunpack.c.h.b16 %v489
    %v582 = vunpack.c.l.b16 %v490
    %v583 = vunpack.c.h.b16 %v490
    %v584 = vunpack.c.l.b16 %v491
    %v585 = vunpack.c.h.b16 %v491
    %v586 = vunpack.c.l.b16 %v492
    %v587 = vunpack.c.h.b16 %v492
    %v588 = vunpack.c.l.b16 %v493
    %v589 = vunpack.c.h.b16 %v493
    %v590 = vunpack.c.l.b16 %v494
    %v591 = vunpack.c.h.b16 %v494
    %v592 = vunpack.c.l.b16 %v495
    %v593 = vunpack.c.h.b16 %v495
    %v594 = vunpack.c.l.b16 %v496
    %v595 = vunpack.c.h.b16 %v496
    %v596 = vunpack.c.l.b16 %v497
    %v597 = vunpack.c.h.b16 %v497
    %v598 = vunpack.c.l.b16 %v498
    %v599 = vunpack.c.h.b16 %v498
    %v600 = vunpack.c.l.b16 %v499
    %v601 = vunpack.c.h.b16 %v499
    %v602 = vunpack.c.l.b16 %v500
    %v603 = vunpack.c.h.b16 %v500
    %v604 = vunpack.c.l.b16 %v501
    %v605 = vunpack.c.h.b16 %v501
    %v606 = vunpack.c.l.b16 %v502
    %v607 = vunpack.c.h.b16 %v502
    %v608 = vunpack.c.l.b16 %v503
    %v609 = vunpack.c.h.b16 %v503
    %v610 = vunpack.c.l.b16 %v504
    %v611 = vunpack.c.h.b16 %v504
    %v612 = vunpack.c.l.b16 %v505
    %v613 = vunpack.c.h.b16 %v505
    %v614 = vunpack.c.l.b16 %v506
    %v615 = vunpack.c.h.b16 %v506
    %v616 = vpack.c.b16 %v554, %v552
    %v617 = vpack.c.b16 %v555, %v553
    %v618 = vpack.c.b16 %v558, %v556
    %v619 = vpack.c.b16 %v559, %v557
    %v620 = vpack.c.b16 %v562, %v560
    %v621 = vpack.c.b16 %v563, %v561
    %v622 = vpack.c.b16 %v566, %v564
    %v623 = vpack.c.b16 %v567, %v565
    %v624 = vpack.c.b16 %v570, %v568
    %v625 = vpack.c.b16 %v571, %v569
    %v626 = vpack.c.b16 %v574, %v572
    %v627 = vpack.c.b16 %v575, %v573
    %v628 = vpack.c.b16 %v578, %v576
    %v629 = vpack.c.b16 %v579, %v577
    %v630 = vpack.c.b16 %v582, %v580
    %v631 = vpack.c.b16 %v583, %v581
    %v632 = vpack.c.b16 %v586, %v584
    %v633 = vpack.c.b16 %v587, %v585
    %v634 = vpack.c.b16 %v590, %v588
    %v635 = vpack.c.b16 %v591, %v589
    %v636 = vpack.c.b16 %v594, %v592
    %v637 = vpack.c.b16 %v595, %v593
    %v638 = vpack.c.b16 %v598, %v596
    %v639 = vpack.c.b16 %v599, %v597
    %v640 = vpack.c.b16 %v602, %v600
    %v641 = vpack.c.b16 %v603, %v601
    %v642 = vpack.c.b16 %v606, %v604
    %v643 = vpack.c.b16 %v607, %v605
    %v644 = vpack.c.b16 %v610, %v608
    %v645 = vpack.c.b16 %v611, %v609
    %v646 = vpack.c.b16 %v614, %v612
    %v647 = vpack.c.b16 %v615, %v613
    %680 = vmatprep.subr.bf16.mxu0 %v617
    %681 = vmatpush1.bf16.msra.mxu0 %v616
    %682 = vmatprep.subr.bf16.mxu0 %v619
    %683 = vmatpush1.bf16.msra.mxu0 %v618
    %684 = vmatprep.subr.bf16.mxu0 %v621
    %685 = vmatpush1.bf16.msra.mxu0 %v620
    %686 = vmatprep.subr.bf16.mxu0 %v623
    %687 = vmatpush1.bf16.msra.mxu0 %v622
    %688 = vmatprep.subr.bf16.mxu0 %v625
    %689 = vmatpush1.bf16.msra.mxu0 %v624
    %690 = vmatprep.subr.bf16.mxu0 %v627
    %691 = vmatpush1.bf16.msra.mxu0 %v626
    %692 = vmatprep.subr.bf16.mxu0 %v629
    %693 = vmatpush1.bf16.msra.mxu0 %v628
    %694 = vmatprep.subr.bf16.mxu0 %v631
    %695 = vmatpush1.bf16.msra.mxu0 %v630
    %696 = vmatprep.subr.bf16.mxu0 %v633
    %697 = vmatpush1.bf16.msra.mxu0 %v632
    %698 = vmatprep.subr.bf16.mxu0 %v635
    %699 = vmatpush1.bf16.msra.mxu0 %v634
    %700 = vmatprep.subr.bf16.mxu0 %v637
    %701 = vmatpush1.bf16.msra.mxu0 %v636
    %702 = vmatprep.subr.bf16.mxu0 %v639
    %703 = vmatpush1.bf16.msra.mxu0 %v638
    %704 = vmatprep.subr.bf16.mxu0 %v641
    %705 = vmatpush1.bf16.msra.mxu0 %v640
    %706 = vmatprep.subr.bf16.mxu0 %v643
    %707 = vmatpush1.bf16.msra.mxu0 %v642
    %708 = vmatprep.subr.bf16.mxu0 %v645
    %709 = vmatpush1.bf16.msra.mxu0 %v644
    %710 = vmatprep.subr.bf16.mxu0 %v647
    %711 = vmatpush1.bf16.msra.mxu0 %v646
    %712 = vmatprep.mubr.bf16.mxu0 %v473
    %713 = vmatmul.mubr.bf16.gmra.mrb[0].mxu0 %v472
    %v714 = vpop.f32.mrb[0].mxu0
    %v715 = vadd.f32 %v513, %v714
    %v716 = vpop.f32.mrb[0].mxu0
    %v717 = vadd.f32 %v517, %v716
    %v718 = vpop.f32.mrb[0].mxu0
    %v719 = vpop.f32.mrb[0].mxu0
    %720 = vdwg.mxu0
    %v721 = vmax.f32 %v715, 0.0
    %v722 = vmax.f32 %v717, 0.0
    %v723 = vpack.c.bf16 %v721, %v721
    %v724 = vpack.c.bf16 %v722, %v722
    %s725 = scalar_lea.vmem [#allocation5], 512
    %v726 = vld [vmem:[%s725] sm:$0xff]
    %v727 = vld [vmem:[%s725 + $0x8] sm:$0xff]
    %v728 = vld [vmem:[%s725 + $0x10] sm:$0xff]
    %v729 = vld [vmem:[%s725 + $0x18] sm:$0xff]
    %v730 = vld [vmem:[%s725 + $0x20] sm:$0xff]
    %v731 = vld [vmem:[%s725 + $0x28] sm:$0xff]
    %v732 = vld [vmem:[%s725 + $0x30] sm:$0xff]
    %v733 = vld [vmem:[%s725 + $0x38] sm:$0xff]
    %v734 = vld [vmem:[%s725 + $0x40] sm:$0xff]
    %v735 = vld [vmem:[%s725 + $0x48] sm:$0xff]
    %v736 = vld [vmem:[%s725 + $0x50] sm:$0xff]
    %v737 = vld [vmem:[%s725 + $0x58] sm:$0xff]
    %v738 = vld [vmem:[%s725 + $0x60] sm:$0xff]
    %v739 = vld [vmem:[%s725 + $0x68] sm:$0xff]
    %v740 = vld [vmem:[%s725 + $0x70] sm:$0xff]
    %v741 = vld [vmem:[%s725 + $0x78] sm:$0xff]
    %v742 = vld [vmem:[%s725 + $0x80] sm:$0xff]
    %v743 = vld [vmem:[%s725 + $0x88] sm:$0xff]
    %v744 = vld [vmem:[%s725 + $0x90] sm:$0xff]
    %v745 = vld [vmem:[%s725 + $0x98] sm:$0xff]
    %v746 = vld [vmem:[%s725 + $0xa0] sm:$0xff]
    %v747 = vld [vmem:[%s725 + $0xa8] sm:$0xff]
    %v748 = vld [vmem:[%s725 + $0xb0] sm:$0xff]
    %v749 = vld [vmem:[%s725 + $0xb8] sm:$0xff]
    %v750 = vld [vmem:[%s725 + $0xc0] sm:$0xff]
    %v751 = vld [vmem:[%s725 + $0xc8] sm:$0xff]
    %v752 = vld [vmem:[%s725 + $0xd0] sm:$0xff]
    %v753 = vld [vmem:[%s725 + $0xd8] sm:$0xff]
    %v754 = vld [vmem:[%s725 + $0xe0] sm:$0xff]
    %v755 = vld [vmem:[%s725 + $0xe8] sm:$0xff]
    %v756 = vld [vmem:[%s725 + $0xf0] sm:$0xff]
    %v757 = vld [vmem:[%s725 + $0xf8] sm:$0xff]
    %s758 = scalar_lea.vmem %s3, 6
    %v759 = vld [vmem:[%s758] sm:$0x3]
    %v761 = vlaneseq
    %v762 = vshrl.u32 %v761, 7
    %v763 = vsub.s32 0, %v762
    %v764 = vrot.slane %v759, %v763
    %v765 = vlaneseq
    %v766 = vshrl.u32 %v765, 7
    %v767 = vsub.s32 1, %v766
    %v768 = vrot.slane %v759, %v767
    %v803 = vunpack.c.l.b16 %v726
    %v804 = vunpack.c.h.b16 %v726
    %v805 = vunpack.c.l.b16 %v727
    %v806 = vunpack.c.h.b16 %v727
    %v807 = vunpack.c.l.b16 %v728
    %v808 = vunpack.c.h.b16 %v728
    %v809 = vunpack.c.l.b16 %v729
    %v810 = vunpack.c.h.b16 %v729
    %v811 = vunpack.c.l.b16 %v730
    %v812 = vunpack.c.h.b16 %v730
    %v813 = vunpack.c.l.b16 %v731
    %v814 = vunpack.c.h.b16 %v731
    %v815 = vunpack.c.l.b16 %v732
    %v816 = vunpack.c.h.b16 %v732
    %v817 = vunpack.c.l.b16 %v733
    %v818 = vunpack.c.h.b16 %v733
    %v819 = vunpack.c.l.b16 %v734
    %v820 = vunpack.c.h.b16 %v734
    %v821 = vunpack.c.l.b16 %v735
    %v822 = vunpack.c.h.b16 %v735
    %v823 = vunpack.c.l.b16 %v736
    %v824 = vunpack.c.h.b16 %v736
    %v825 = vunpack.c.l.b16 %v737
    %v826 = vunpack.c.h.b16 %v737
    %v827 = vunpack.c.l.b16 %v738
    %v828 = vunpack.c.h.b16 %v738
    %v829 = vunpack.c.l.b16 %v739
    %v830 = vunpack.c.h.b16 %v739
    %v831 = vunpack.c.l.b16 %v740
    %v832 = vunpack.c.h.b16 %v740
    %v833 = vunpack.c.l.b16 %v741
    %v834 = vunpack.c.h.b16 %v741
    %v835 = vunpack.c.l.b16 %v742
    %v836 = vunpack.c.h.b16 %v742
    %v837 = vunpack.c.l.b16 %v743
    %v838 = vunpack.c.h.b16 %v743
    %v839 = vunpack.c.l.b16 %v744
    %v840 = vunpack.c.h.b16 %v744
    %v841 = vunpack.c.l.b16 %v745
    %v842 = vunpack.c.h.b16 %v745
    %v843 = vunpack.c.l.b16 %v746
    %v844 = vunpack.c.h.b16 %v746
    %v845 = vunpack.c.l.b16 %v747
    %v846 = vunpack.c.h.b16 %v747
    %v847 = vunpack.c.l.b16 %v748
    %v848 = vunpack.c.h.b16 %v748
    %v849 = vunpack.c.l.b16 %v749
    %v850 = vunpack.c.h.b16 %v749
    %v851 = vunpack.c.l.b16 %v750
    %v852 = vunpack.c.h.b16 %v750
    %v853 = vunpack.c.l.b16 %v751
    %v854 = vunpack.c.h.b16 %v751
    %v855 = vunpack.c.l.b16 %v752
    %v856 = vunpack.c.h.b16 %v752
    %v857 = vunpack.c.l.b16 %v753
    %v858 = vunpack.c.h.b16 %v753
    %v859 = vunpack.c.l.b16 %v754
    %v860 = vunpack.c.h.b16 %v754
    %v861 = vunpack.c.l.b16 %v755
    %v862 = vunpack.c.h.b16 %v755
    %v863 = vunpack.c.l.b16 %v756
    %v864 = vunpack.c.h.b16 %v756
    %v865 = vunpack.c.l.b16 %v757
    %v866 = vunpack.c.h.b16 %v757
    %v867 = vpack.c.b16 %v805, %v803
    %v868 = vpack.c.b16 %v806, %v804
    %v869 = vpack.c.b16 %v809, %v807
    %v870 = vpack.c.b16 %v810, %v808
    %v871 = vpack.c.b16 %v813, %v811
    %v872 = vpack.c.b16 %v814, %v812
    %v873 = vpack.c.b16 %v817, %v815
    %v874 = vpack.c.b16 %v818, %v816
    %v875 = vpack.c.b16 %v821, %v819
    %v876 = vpack.c.b16 %v822, %v820
    %v877 = vpack.c.b16 %v825, %v823
    %v878 = vpack.c.b16 %v826, %v824
    %v879 = vpack.c.b16 %v829, %v827
    %v880 = vpack.c.b16 %v830, %v828
    %v881 = vpack.c.b16 %v833, %v831
    %v882 = vpack.c.b16 %v834, %v832
    %v883 = vpack.c.b16 %v837, %v835
    %v884 = vpack.c.b16 %v838, %v836
    %v885 = vpack.c.b16 %v841, %v839
    %v886 = vpack.c.b16 %v842, %v840
    %v887 = vpack.c.b16 %v845, %v843
    %v888 = vpack.c.b16 %v846, %v844
    %v889 = vpack.c.b16 %v849, %v847
    %v890 = vpack.c.b16 %v850, %v848
    %v891 = vpack.c.b16 %v853, %v851
    %v892 = vpack.c.b16 %v854, %v852
    %v893 = vpack.c.b16 %v857, %v855
    %v894 = vpack.c.b16 %v858, %v856
    %v895 = vpack.c.b16 %v861, %v859
    %v896 = vpack.c.b16 %v862, %v860
    %v897 = vpack.c.b16 %v865, %v863
    %v898 = vpack.c.b16 %v866, %v864
    %931 = vmatprep.subr.bf16.mxu0 %v868
    %932 = vmatpush1.bf16.msra.mxu0 %v867
    %933 = vmatprep.subr.bf16.mxu0 %v870
    %934 = vmatpush1.bf16.msra.mxu0 %v869
    %935 = vmatprep.subr.bf16.mxu0 %v872
    %936 = vmatpush1.bf16.msra.mxu0 %v871
    %937 = vmatprep.subr.bf16.mxu0 %v874
    %938 = vmatpush1.bf16.msra.mxu0 %v873
    %939 = vmatprep.subr.bf16.mxu0 %v876
    %940 = vmatpush1.bf16.msra.mxu0 %v875
    %941 = vmatprep.subr.bf16.mxu0 %v878
    %942 = vmatpush1.bf16.msra.mxu0 %v877
    %943 = vmatprep.subr.bf16.mxu0 %v880
    %944 = vmatpush1.bf16.msra.mxu0 %v879
    %945 = vmatprep.subr.bf16.mxu0 %v882
    %946 = vmatpush1.bf16.msra.mxu0 %v881
    %947 = vmatprep.subr.bf16.mxu0 %v884
    %948 = vmatpush1.bf16.msra.mxu0 %v883
    %949 = vmatprep.subr.bf16.mxu0 %v886
    %950 = vmatpush1.bf16.msra.mxu0 %v885
    %951 = vmatprep.subr.bf16.mxu0 %v888
    %952 = vmatpush1.bf16.msra.mxu0 %v887
    %953 = vmatprep.subr.bf16.mxu0 %v890
    %954 = vmatpush1.bf16.msra.mxu0 %v889
    %955 = vmatprep.subr.bf16.mxu0 %v892
    %956 = vmatpush1.bf16.msra.mxu0 %v891
    %957 = vmatprep.subr.bf16.mxu0 %v894
    %958 = vmatpush1.bf16.msra.mxu0 %v893
    %959 = vmatprep.subr.bf16.mxu0 %v896
    %960 = vmatpush1.bf16.msra.mxu0 %v895
    %961 = vmatprep.subr.bf16.mxu0 %v898
    %962 = vmatpush1.bf16.msra.mxu0 %v897
    %963 = vmatprep.mubr.bf16.mxu0 %v724
    %964 = vmatmul.mubr.bf16.gmra.mrb[0].mxu0 %v723
    %v965 = vpop.f32.mrb[0].mxu0
    %v966 = vadd.f32 %v764, %v965
    %v967 = vpop.f32.mrb[0].mxu0
    %v968 = vadd.f32 %v768, %v967
    %v969 = vpop.f32.mrb[0].mxu0
    %v970 = vpop.f32.mrb[0].mxu0
    %971 = vdwg.mxu0
    %v972 = vmax.f32 %v966, 0.0
    %v973 = vmax.f32 %v968, 0.0
    %974 = vst [vmem:[#allocation9] sm:$0xff] %v972
    %975 = vst [vmem:[#allocation9 + $0x8] sm:$0xff] %v973
    %v976 = vpack.c.bf16 %v972, %v972
    %v977 = vpack.c.bf16 %v973, %v973
    %v978 = vld [vmem:[#allocation7] sm:$0xf]
    %v979 = vld [vmem:[#allocation7 + $0x4] sm:$0xf]
    %v980 = vld [vmem:[#allocation7 + $0x8] sm:$0xf]
    %v981 = vld [vmem:[#allocation7 + $0xc] sm:$0xf]
    %v982 = vld [vmem:[#allocation7 + $0x10] sm:$0xf]
    %v983 = vld [vmem:[#allocation7 + $0x14] sm:$0xf]
    %v984 = vld [vmem:[#allocation7 + $0x18] sm:$0xf]
    %v985 = vld [vmem:[#allocation7 + $0x1c] sm:$0xf]
    %v986 = vld [vmem:[#allocation7 + $0x20] sm:$0xf]
    %v987 = vld [vmem:[#allocation7 + $0x24] sm:$0xf]
    %v988 = vld [vmem:[#allocation7 + $0x28] sm:$0xf]
    %v989 = vld [vmem:[#allocation7 + $0x2c] sm:$0xf]
    %v990 = vld [vmem:[#allocation7 + $0x30] sm:$0xf]
    %v991 = vld [vmem:[#allocation7 + $0x34] sm:$0xf]
    %v992 = vld [vmem:[#allocation7 + $0x38] sm:$0xf]
    %v993 = vld [vmem:[#allocation7 + $0x3c] sm:$0xf]
    %v994 = vld [vmem:[#allocation7 + $0x40] sm:$0xf]
    %v995 = vld [vmem:[#allocation7 + $0x44] sm:$0xf]
    %v996 = vld [vmem:[#allocation7 + $0x48] sm:$0xf]
    %v997 = vld [vmem:[#allocation7 + $0x4c] sm:$0xf]
    %v998 = vld [vmem:[#allocation7 + $0x50] sm:$0xf]
    %v999 = vld [vmem:[#allocation7 + $0x54] sm:$0xf]
    %v1000 = vld [vmem:[#allocation7 + $0x58] sm:$0xf]
    %v1001 = vld [vmem:[#allocation7 + $0x5c] sm:$0xf]
    %v1002 = vld [vmem:[#allocation7 + $0x60] sm:$0xf]
    %v1003 = vld [vmem:[#allocation7 + $0x64] sm:$0xf]
    %v1004 = vld [vmem:[#allocation7 + $0x68] sm:$0xf]
    %v1005 = vld [vmem:[#allocation7 + $0x6c] sm:$0xf]
    %v1006 = vld [vmem:[#allocation7 + $0x70] sm:$0xf]
    %v1007 = vld [vmem:[#allocation7 + $0x74] sm:$0xf]
    %v1008 = vld [vmem:[#allocation7 + $0x78] sm:$0xf]
    %v1009 = vld [vmem:[#allocation7 + $0x7c] sm:$0xf]
    %v1010 = vld [vmem:[%s5] sm:$0x1]
    %v1012 = vlaneseq
    %v1013 = vshrl.u32 %v1012, 7
    %v1014 = vsub.s32 0, %v1013
    %v1015 = vrot.slane %v1010, %v1014
    %v1049 = vunpack.c.l.b16 %v978
    %v1050 = vunpack.c.l.b16 %v979
    %v1051 = vunpack.c.l.b16 %v980
    %v1052 = vunpack.c.l.b16 %v981
    %v1053 = vunpack.c.l.b16 %v982
    %v1054 = vunpack.c.l.b16 %v983
    %v1055 = vunpack.c.l.b16 %v984
    %v1056 = vunpack.c.l.b16 %v985
    %v1057 = vunpack.c.l.b16 %v986
    %v1058 = vunpack.c.l.b16 %v987
    %v1059 = vunpack.c.l.b16 %v988
    %v1060 = vunpack.c.l.b16 %v989
    %v1061 = vunpack.c.l.b16 %v990
    %v1062 = vunpack.c.l.b16 %v991
    %v1063 = vunpack.c.l.b16 %v992
    %v1064 = vunpack.c.l.b16 %v993
    %v1065 = vunpack.c.l.b16 %v994
    %v1066 = vunpack.c.l.b16 %v995
    %v1067 = vunpack.c.l.b16 %v996
    %v1068 = vunpack.c.l.b16 %v997
    %v1069 = vunpack.c.l.b16 %v998
    %v1070 = vunpack.c.l.b16 %v999
    %v1071 = vunpack.c.l.b16 %v1000
    %v1072 = vunpack.c.l.b16 %v1001
    %v1073 = vunpack.c.l.b16 %v1002
    %v1074 = vunpack.c.l.b16 %v1003
    %v1075 = vunpack.c.l.b16 %v1004
    %v1076 = vunpack.c.l.b16 %v1005
    %v1077 = vunpack.c.l.b16 %v1006
    %v1078 = vunpack.c.l.b16 %v1007
    %v1079 = vunpack.c.l.b16 %v1008
    %v1080 = vunpack.c.l.b16 %v1009
    %v1081 = vpack.c.b16 %v1050, %v1049
    %v1082 = vpack.c.b16 %v1052, %v1051
    %v1083 = vpack.c.b16 %v1054, %v1053
    %v1084 = vpack.c.b16 %v1056, %v1055
    %v1085 = vpack.c.b16 %v1058, %v1057
    %v1086 = vpack.c.b16 %v1060, %v1059
    %v1087 = vpack.c.b16 %v1062, %v1061
    %v1088 = vpack.c.b16 %v1064, %v1063
    %v1089 = vpack.c.b16 %v1066, %v1065
    %v1090 = vpack.c.b16 %v1068, %v1067
    %v1091 = vpack.c.b16 %v1070, %v1069
    %v1092 = vpack.c.b16 %v1072, %v1071
    %v1093 = vpack.c.b16 %v1074, %v1073
    %v1094 = vpack.c.b16 %v1076, %v1075
    %v1095 = vpack.c.b16 %v1078, %v1077
    %v1096 = vpack.c.b16 %v1080, %v1079
    %1113 = vmatprep.subr.bf16.mxu0 0
    %1114 = vmatpush1.bf16.msra.mxu0 %v1081
    %1115 = vmatprep.subr.bf16.mxu0 0
    %1116 = vmatpush1.bf16.msra.mxu0 %v1082
    %1117 = vmatprep.subr.bf16.mxu0 0
    %1118 = vmatpush1.bf16.msra.mxu0 %v1083
    %1119 = vmatprep.subr.bf16.mxu0 0
    %1120 = vmatpush1.bf16.msra.mxu0 %v1084
    %1121 = vmatprep.subr.bf16.mxu0 0
    %1122 = vmatpush1.bf16.msra.mxu0 %v1085
    %1123 = vmatprep.subr.bf16.mxu0 0
    %1124 = vmatpush1.bf16.msra.mxu0 %v1086
    %1125 = vmatprep.subr.bf16.mxu0 0
    %1126 = vmatpush1.bf16.msra.mxu0 %v1087
    %1127 = vmatprep.subr.bf16.mxu0 0
    %1128 = vmatpush1.bf16.msra.mxu0 %v1088
    %1129 = vmatprep.subr.bf16.mxu0 0
    %1130 = vmatpush1.bf16.msra.mxu0 %v1089
    %1131 = vmatprep.subr.bf16.mxu0 0
    %1132 = vmatpush1.bf16.msra.mxu0 %v1090
    %1133 = vmatprep.subr.bf16.mxu0 0
    %1134 = vmatpush1.bf16.msra.mxu0 %v1091
    %1135 = vmatprep.subr.bf16.mxu0 0
    %1136 = vmatpush1.bf16.msra.mxu0 %v1092
    %1137 = vmatprep.subr.bf16.mxu0 0
    %1138 = vmatpush1.bf16.msra.mxu0 %v1093
    %1139 = vmatprep.subr.bf16.mxu0 0
    %1140 = vmatpush1.bf16.msra.mxu0 %v1094
    %1141 = vmatprep.subr.bf16.mxu0 0
    %1142 = vmatpush1.bf16.msra.mxu0 %v1095
    %1143 = vmatprep.subr.bf16.mxu0 0
    %1144 = vmatpush1.bf16.msra.mxu0 %v1096
    %1145 = vmatprep.mubr.bf16.mxu0 %v977
    %1146 = vmatmul.mubr.bf16.gmra.mrb[0].mxu0 %v976
    %v1147 = vpop.f32.mrb[0].mxu0
    %v1148 = vadd.f32 %v1015, %v1147
    %v1149 = vpop.f32.mrb[0].mxu0
    %v1150 = vpop.f32.mrb[0].mxu0
    %v1151 = vpop.f32.mrb[0].mxu0
    %1152 = vdwg.mxu0
    %1153 = vst [vmem:[#allocation8] sm:$0xff] %v1148
    // Predicated region
    $region38: #{fully_connected_forward.1} parent=1 // pred_check
      _
    $region39: #{fully_connected_forward.1} parent=1 // pred_check_branch
      %1155 = sbr.rel (0) target = $region41
    $region40: #{fully_connected_forward.1} parent=1 // pred_region
      %s1157 = ssub.s32 128, 128
      %1158 = vsyncadd [#allocation4], %s1157
      %s1160 = sshll.u32 [#allocation8], 4
      %s1161 = int_to_ptr.vmem [resolvable:$true] %s1160
      %1163 = dma.vmem_to_hbm [thread:$0]  %s1161, 128, %s6, [#allocation4]
    $region41: #{fully_connected_forward.1} parent=1 // pred_fallthru
      _
    // Predicated region
    $region42: #{fully_connected_forward.1} parent=1 // pred_check
      _
    $region43: #{fully_connected_forward.1} parent=1 // pred_check_branch
      %1165 = sbr.rel (0) target = $region45
    $region44: #{fully_connected_forward.1} parent=1 // pred_region
      %s1167 = ssub.s32 256, 256
      %1168 = vsyncadd [#allocation10], %s1167
      %s1170 = sshll.u32 [#allocation9], 4
      %s1171 = int_to_ptr.vmem [resolvable:$true] %s1170
      %1173 = dma.vmem_to_hbm [thread:$0]  %s1171, 256, %s7, [#allocation10]
    $region45: #{fully_connected_forward.1} parent=1 // pred_fallthru
      _
    // Predicated region
    $region46: #{fully_connected_forward.1} parent=1 // pred_check
      _
    $region47: #{fully_connected_forward.1} parent=1 // pred_check_branch
      %1175 = sbr.rel (0) target = $region49
    $region48: #{fully_connected_forward.1} parent=1 // pred_region
      %1176 = dma.done [#allocation4], 128
    $region49: #{fully_connected_forward.1} parent=1 // pred_fallthru
      _
    // Predicated region
    $region50: #{fully_connected_forward.1} parent=1 // pred_check
      _
    $region51: #{fully_connected_forward.1} parent=1 // pred_check_branch
      %1178 = sbr.rel (0) target = $region53
    $region52: #{fully_connected_forward.1} parent=1 // pred_region
      %1179 = dma.done [#allocation10], 256
    $region53: #{fully_connected_forward.1} parent=1 // pred_fallthru
      _
    %1180 = vsyncpa [#allocation3], 1
    %1181 = vsyncpa [#allocation6], 1
    %1182 = vsyncpa [#allocation4], 1
    %1183 = vsyncpa [#allocation10], 1

</llo_original>
